<compile_context>
chip_gen: v7x
topology: tpu7x:2x2x1
jax: 0.10.0
libtpu: 0.0.40
codegen_flags: <defaults>
</compile_context>

<pallas_src>
import jax
import jax.numpy as jnp
from jax.experimental import pallas as pl
from jax.experimental.pallas import tpu as pltpu


# ---------------------------------------------------------------- kernel ----

def _masked_linear_kernel(x_ref, w_ref, b_ref, o_ref):
    # x_ref: (tb, K) bf16   w_ref: (tn, K) bf16 (already masked)   b_ref: (1, tn) f32
    acc = jax.lax.dot_general(
        x_ref[...], w_ref[...],
        dimension_numbers=(((1,), (1,)), ((), ())),   # contract K vs K: no .T
        preferred_element_type=jnp.float32)           # (tb, tn) f32 accumulate
    o_ref[...] = (acc + b_ref[...]).astype(o_ref.dtype)


# ---------------------------------------------------------------- wrapper ---

def _round_up(x, m):
    return (x + m - 1) // m * m


def masked_linear(x, weight, mask, bias, cond_inputs=None, cond_weight=None,
                  *, tb=256, tn=256, compute_dtype=jnp.bfloat16):
    """Pallas implementation of MaskedLinear.forward.

    x:           (B, in_features)               float32
    weight/mask: (out_features, in_features)    PyTorch layout
    bias:        (out_features,)
    cond_inputs: (B, cond_in_features) or None
    cond_weight: (out_features, cond_in_features) or None
    returns:     (B, out_features)              x.dtype
    """
    B, _ = x.shape
    out_f = weight.shape[0]

    # ---- one-time per-call prep: apply mask (f32), fuse cond, cast, pad ----
    wm = (weight * mask).astype(jnp.float32)
    x_full = x
    if cond_inputs is not None:
        wm = jnp.concatenate([wm, cond_weight.astype(jnp.float32)], axis=1)
        x_full = jnp.concatenate([x, cond_inputs], axis=1)
    k = x_full.shape[1]

    k_pad = _round_up(k, 128)            # lane-dense contraction dim
    out_pad = _round_up(out_f, 128)      # lane-dense output dim

    # batch tile: as large as requested but never larger than the batch itself
    tb = _round_up(min(tb, _round_up(B, 8)), 8)
    b_pad = _round_up(B, tb)
    # out-feature tile: a multiple of 128 that divides the padded out dim
    tn = 256 if (tn >= 256 and out_pad % 256 == 0) else 128

    x_p = jnp.zeros((b_pad, k_pad), compute_dtype).at[:B, :k].set(
        x_full.astype(compute_dtype))
    w_p = jnp.zeros((out_pad, k_pad), compute_dtype).at[:out_f, :k].set(
        wm.astype(compute_dtype))
    b_p = jnp.zeros((1, out_pad), jnp.float32).at[0, :out_f].set(
        bias.astype(jnp.float32))

    nb, nn = b_pad // tb, out_pad // tn

    # Scoped VMEM: double-buffered inputs/outputs + headroom, under v7x 64 MiB.
    elt = jnp.dtype(compute_dtype).itemsize
    step_bytes = 2 * ((tb + tn) * k_pad * elt + tb * tn * 4) + tn * 4
    vmem_limit = int(min(56 * 1024 * 1024, max(16 * 1024 * 1024, 2 * step_bytes)))

    out_p = pl.pallas_call(
        _masked_linear_kernel,
        out_shape=jax.ShapeDtypeStruct((b_pad, out_pad), x.dtype),
        grid_spec=pltpu.PrefetchScalarGridSpec(
            num_scalar_prefetch=0,
            grid=(nb, nn),
            in_specs=[
                pl.BlockSpec((tb, k_pad), lambda i, j: (i, 0)),   # x tile
                pl.BlockSpec((tn, k_pad), lambda i, j: (j, 0)),   # masked weight tile
                pl.BlockSpec((1, tn), lambda i, j: (0, j)),       # bias tile
            ],
            out_specs=pl.BlockSpec((tb, tn), lambda i, j: (i, j)),
        ),
        compiler_params=pltpu.CompilerParams(
            dimension_semantics=("parallel", "parallel"),
            vmem_limit_bytes=vmem_limit,
        ),
    )(x_p, w_p, b_p)

    return out_p[:B, :out_f]


# ------------------------------------------------------------------ demo ----

if __name__ == "__main__":
    # Small MADE-style layer shapes implied by the module.
    B, in_features, out_features, cond_in_features = 16, 32, 64, 16

    key = jax.random.PRNGKey(0)
    kx, kc, kw, kb, kwc = jax.random.split(key, 5)

    x = jax.random.normal(kx, (B, in_features), dtype=jnp.float32)
    cond = jax.random.normal(kc, (B, cond_in_features), dtype=jnp.float32)

    # The PyTorch module zero-inits weights (trivial test), so use deterministic
    # random values of the same shapes instead.
    weight = jax.random.normal(kw, (out_features, in_features), jnp.float32) * 0.1
    bias = jax.random.normal(kb, (out_features,), jnp.float32) * 0.1
    cond_weight = jax.random.normal(kwc, (out_features, cond_in_features),
                                    jnp.float32) * 0.1

    # MADE-style autoregressive binary mask.
    in_deg = jnp.arange(in_features) % (in_features - 1)
    out_deg = jnp.arange(out_features) % (in_features - 1)
    mask = (out_deg[:, None] >= in_deg[None, :]).astype(jnp.float32)

    out = jax.block_until_ready(
        masked_linear(x, weight, mask, bias, cond, cond_weight))

    # References: one matched to the kernel's bf16-operand / f32-accum math
    # (tight check of the tiling/plumbing), one pure-f32 (semantics check).
    def q(a):
        return a.astype(jnp.bfloat16).astype(jnp.float32)

    wm = weight * mask
    ref_q = q(x) @ q(wm).T + bias[None, :] + q(cond) @ q(cond_weight).T
    ref_f32 = x @ wm.T + bias[None, :] + cond @ cond_weight.T

    assert out.shape == (B, out_features)
    assert jnp.allclose(out, ref_q, atol=1e-4, rtol=1e-4), "mismatch vs bf16-matched ref"
    assert jnp.allclose(out, ref_f32, atol=3e-2, rtol=3e-2), "mismatch vs f32 ref"

    # Also exercise the cond_inputs=None path.
    out_nc = jax.block_until_ready(masked_linear(x, weight, mask, bias))
    ref_nc = q(x) @ q(wm).T + bias[None, :]
    assert jnp.allclose(out_nc, ref_nc, atol=1e-4, rtol=1e-4)

    print("KERNEL_OK")
</pallas_src>

<mosaic_0001>
module attributes {stable_mosaic.version = 11 : i64} {
  func.func @_masked_linear_kernel(%arg0: i32, %arg1: i32, %arg2: memref<16x128xbf16, #tpu.memory_space<vmem>>, %arg3: memref<128x128xbf16, #tpu.memory_space<vmem>>, %arg4: memref<1x128xf32, #tpu.memory_space<vmem>>, %arg5: memref<16x128xf32, #tpu.memory_space<vmem>>) attributes {dimension_semantics = [#tpu.dimension_semantics<parallel>, #tpu.dimension_semantics<parallel>], iteration_bounds = array<i64: 1, 1>, scalar_prefetch = 0 : i64, scratch_operands = 0 : i64, tpu.core_type = #tpu.core_type<tc>, window_params = [{transform_indices = @transform_0, window_bounds = array<i64: 16, 128>}, {transform_indices = @transform_1, window_bounds = array<i64: 128, 128>}, {transform_indices = @transform_2, window_bounds = array<i64: 1, 128>}, {transform_indices = @transform_3, window_bounds = array<i64: 16, 128>}]} {
    %c0 = arith.constant 0 : index
    %c0_0 = arith.constant 0 : index
    %0 = vector.load %arg2[%c0, %c0_0] : memref<16x128xbf16, #tpu.memory_space<vmem>>, vector<16x128xbf16>
    %c0_1 = arith.constant 0 : index
    %c0_2 = arith.constant 0 : index
    %1 = vector.load %arg3[%c0_1, %c0_2] : memref<128x128xbf16, #tpu.memory_space<vmem>>, vector<128x128xbf16>
    %cst = arith.constant dense<0.000000e+00> : vector<16x128xf32>
    %2 = tpu.matmul %0, %1, %cst {dimension_numbers = #tpu.dot_dimension_numbers<[1], [1], [0], [0], [0, 0, 1, 0], [], []>} : vector<16x128xbf16>, vector<128x128xbf16>, vector<16x128xf32> -> vector<16x128xf32>
    %c0_3 = arith.constant 0 : index
    %c0_4 = arith.constant 0 : index
    %3 = vector.load %arg4[%c0_3, %c0_4] : memref<1x128xf32, #tpu.memory_space<vmem>>, vector<1x128xf32>
    %4 = vector.broadcast %3 : vector<1x128xf32> to vector<16x128xf32>
    %5 = arith.addf %2, %4 : vector<16x128xf32>
    %c0_5 = arith.constant 0 : index
    %c0_6 = arith.constant 0 : index
    %6 = vector.load %arg5[%c0_5, %c0_6] : memref<16x128xf32, #tpu.memory_space<vmem>>, vector<16x128xf32>
    tpu.vector_store %arg5[%c0_5, %c0_6], %5 {strides = array<i32>} : memref<16x128xf32, #tpu.memory_space<vmem>>, vector<16x128xf32>,
    return
  }
  func.func @transform_0(%arg0: i32, %arg1: i32) -> (i32, i32) {
    %c0_i32 = arith.constant 0 : i32
    %c0_i32_0 = arith.constant 0 : i32
    return %arg0, %c0_i32 : i32, i32
  }
  func.func @transform_1(%arg0: i32, %arg1: i32) -> (i32, i32) {
    %c0_i32 = arith.constant 0 : i32
    %c0_i32_0 = arith.constant 0 : i32
    return %arg1, %c0_i32 : i32, i32
  }
  func.func @transform_2(%arg0: i32, %arg1: i32) -> (i32, i32) {
    %c0_i32 = arith.constant 0 : i32
    %c0_i32_0 = arith.constant 0 : i32
    return %c0_i32, %arg1 : i32, i32
  }
  func.func @transform_3(%arg0: i32, %arg1: i32) -> (i32, i32) {
    %c0_i32 = arith.constant 0 : i32
    return %arg0, %arg1 : i32, i32
  }
}

</mosaic_0001>

<llo_original>
// kernel: tpu_custom_call.1
$region0: #{tpu_custom_call.1}
  #allocation0 [shape = 'u32[]', space=smem, size = 0x4, offset = 0x4, fixed_abs, tag = 'smem constant byte address 0x4 - core index']
  #allocation1 [shape = 'u32[144,128]{1,0:T(1,128)}', space=vmem, size = 0x12000, scoped, tag = 'internal scratch']
  %s0 = inlined_call_operand.hbm [shape: bf16[16,128], index: 0, kind: input, shape index: {}]
  %s1 = inlined_call_operand.hbm [shape: bf16[128,128], index: 1, kind: input, shape index: {}]
  %s2 = inlined_call_operand.vmem [shape: f32[1,128], index: 2, kind: input, shape index: {}]
  %s3 = inlined_call_operand.hbm [shape: f32[16,128], index: 3, kind: output, shape index: {}]
  %s4 = sld [smem:[#allocation0]]
  $region30: #{tpu_custom_call.1} parent=0
    _
  %s6 = ssub.s32 1, %s4
  %s7 = scalar_select 0, %s6, %s4
  $region1: #{tpu_custom_call.1} parent=0
    #allocation2 [shape = 'u8[4096]{0}', space=vmem, size = 0x1000, scoped, tag = 'input window, operand 0, single buffered']
    #allocation3 [shape = 's32[1]{0}', space=sflag, size = 0x4, scoped, tag = 'scoped memory for tpu_custom_call.1']
    #allocation4 [shape = 's32[1]{0}', space=sflag, size = 0x4, scoped, tag = 'scoped memory for tpu_custom_call.1']
    #allocation5 [shape = 'u8[32768]{0}', space=vmem, size = 0x8000, scoped, tag = 'input window, operand 1, single buffered']
    #allocation6 [shape = 's32[1]{0}', space=sflag, size = 0x4, scoped, tag = 'scoped memory for tpu_custom_call.1']
    #allocation7 [shape = 'u8[8192]{0}', space=vmem, size = 0x2000, scoped, tag = 'output window, operand 0, single buffered']
    %8 = vsyncpa [#allocation3], 0
    %9 = vsyncpa [#allocation6], 0
    %10 = vsyncpa [#allocation4], 0
    // Predicated region
    $region2: #{tpu_custom_call.1} parent=1 // pred_check
      _
    $region3: #{tpu_custom_call.1} parent=1 // pred_check_branch
      %12 = sbr.rel (0) target = $region5
    $region4: #{tpu_custom_call.1} parent=1 // pred_region
      %s14 = ssub.s32 128, 128
      %15 = vsyncadd [#allocation3], %s14
      %s16 = sshll.u32 [#allocation2], 4
      %s17 = int_to_ptr.vmem [resolvable:$true] %s16
      %22 = dma.hbm_to_vmem [thread:$0]  %s0, 128, %s17, [#allocation3], 64, 64, 4
    $region5: #{tpu_custom_call.1} parent=1 // pred_fallthru
      _
    // Predicated region
    $region6: #{tpu_custom_call.1} parent=1 // pred_check
      _
    $region7: #{tpu_custom_call.1} parent=1 // pred_check_branch
      %24 = sbr.rel (0) target = $region9
    $region8: #{tpu_custom_call.1} parent=1 // pred_region
      %s26 = ssub.s32 1024, 1024
      %27 = vsyncadd [#allocation6], %s26
      %s28 = sshll.u32 [#allocation5], 4
      %s29 = int_to_ptr.vmem [resolvable:$true] %s28
      %34 = dma.hbm_to_vmem [thread:$0]  %s1, 1024, %s29, [#allocation6], 64, 64, 4
    $region9: #{tpu_custom_call.1} parent=1 // pred_fallthru
      _
    // Predicated region
    $region10: #{tpu_custom_call.1} parent=1 // pred_check
      _
    $region11: #{tpu_custom_call.1} parent=1 // pred_check_branch
      %36 = sbr.rel (0) target = $region13
    $region12: #{tpu_custom_call.1} parent=1 // pred_region
      _
    $region13: #{tpu_custom_call.1} parent=1 // pred_fallthru
      _
    // Predicated region
    $region14: #{tpu_custom_call.1} parent=1 // pred_check
      _
    $region15: #{tpu_custom_call.1} parent=1 // pred_check_branch
      %38 = sbr.rel (0) target = $region17
    $region16: #{tpu_custom_call.1} parent=1 // pred_region
      %39 = dma.done [#allocation3], 128
    $region17: #{tpu_custom_call.1} parent=1 // pred_fallthru
      _
    // Predicated region
    $region18: #{tpu_custom_call.1} parent=1 // pred_check
      _
    $region19: #{tpu_custom_call.1} parent=1 // pred_check_branch
      %41 = sbr.rel (0) target = $region21
    $region20: #{tpu_custom_call.1} parent=1 // pred_region
      %42 = dma.done [#allocation6], 1024
    $region21: #{tpu_custom_call.1} parent=1 // pred_fallthru
      _
    %v44 = vld [vmem:[#allocation2] sm:$0xf]
    %v45 = vld [vmem:[#allocation2 + $0x4] sm:$0xf]
    %v46 = vld [vmem:[#allocation5] sm:$0xf]
    %v47 = vld [vmem:[#allocation5 + $0x4] sm:$0xf]
    %v48 = vld [vmem:[#allocation5 + $0x8] sm:$0xf]
    %v49 = vld [vmem:[#allocation5 + $0xc] sm:$0xf]
    %v50 = vld [vmem:[#allocation5 + $0x10] sm:$0xf]
    %v51 = vld [vmem:[#allocation5 + $0x14] sm:$0xf]
    %v52 = vld [vmem:[#allocation5 + $0x18] sm:$0xf]
    %v53 = vld [vmem:[#allocation5 + $0x1c] sm:$0xf]
    %v54 = vld [vmem:[#allocation5 + $0x20] sm:$0xf]
    %v55 = vld [vmem:[#allocation5 + $0x24] sm:$0xf]
    %v56 = vld [vmem:[#allocation5 + $0x28] sm:$0xf]
    %v57 = vld [vmem:[#allocation5 + $0x2c] sm:$0xf]
    %v58 = vld [vmem:[#allocation5 + $0x30] sm:$0xf]
    %v59 = vld [vmem:[#allocation5 + $0x34] sm:$0xf]
    %v60 = vld [vmem:[#allocation5 + $0x38] sm:$0xf]
    %v61 = vld [vmem:[#allocation5 + $0x3c] sm:$0xf]
    %v62 = vld [vmem:[%s2] sm:$0x1]
    %v64 = vlaneseq
    %v65 = vshrl.u32 %v64, 7
    %v66 = vsub.s32 0, %v65
    %v67 = vrot.slane %v62, %v66
    %v71 = vunpack.c.l.b16 %v44
    %v72 = vunpack.c.l.b16 %v45
    %v73 = vpack.c.b16 %v72, %v71
    %v91 = vunpack.c.l.b16 %v46
    %v92 = vunpack.c.l.b16 %v47
    %v93 = vunpack.c.l.b16 %v48
    %v94 = vunpack.c.l.b16 %v49
    %v95 = vunpack.c.l.b16 %v50
    %v96 = vunpack.c.l.b16 %v51
    %v97 = vunpack.c.l.b16 %v52
    %v98 = vunpack.c.l.b16 %v53
    %v99 = vunpack.c.l.b16 %v54
    %v100 = vunpack.c.l.b16 %v55
    %v101 = vunpack.c.l.b16 %v56
    %v102 = vunpack.c.l.b16 %v57
    %v103 = vunpack.c.l.b16 %v58
    %v104 = vunpack.c.l.b16 %v59
    %v105 = vunpack.c.l.b16 %v60
    %v106 = vunpack.c.l.b16 %v61
    %v107 = vpack.c.b16 %v92, %v91
    %v108 = vpack.c.b16 %v94, %v93
    %v109 = vpack.c.b16 %v96, %v95
    %v110 = vpack.c.b16 %v98, %v97
    %v111 = vpack.c.b16 %v100, %v99
    %v112 = vpack.c.b16 %v102, %v101
    %v113 = vpack.c.b16 %v104, %v103
    %v114 = vpack.c.b16 %v106, %v105
    %123 = vmatprep.subr.bf16.mxu0 0
    %124 = vmatpush1.bf16.xpose.msra.mxu0 %v107
    %125 = vmatprep.subr.bf16.mxu0 0
    %126 = vmatpush1.bf16.xpose.msra.mxu0 %v108
    %127 = vmatprep.subr.bf16.mxu0 0
    %128 = vmatpush1.bf16.xpose.msra.mxu0 %v109
    %129 = vmatprep.subr.bf16.mxu0 0
    %130 = vmatpush1.bf16.xpose.msra.mxu0 %v110
    %131 = vmatprep.subr.bf16.mxu0 0
    %132 = vmatpush1.bf16.xpose.msra.mxu0 %v111
    %133 = vmatprep.subr.bf16.mxu0 0
    %134 = vmatpush1.bf16.xpose.msra.mxu0 %v112
    %135 = vmatprep.subr.bf16.mxu0 0
    %136 = vmatpush1.bf16.xpose.msra.mxu0 %v113
    %137 = vmatprep.subr.bf16.mxu0 0
    %138 = vmatpush1.bf16.xpose.msra.mxu0 %v114
    %139 = vmatprep.subr.bf16.mxu0 0
    %140 = vmatpush1.bf16.xpose.msra.mxu0 0
    %141 = vmatprep.subr.bf16.mxu0 0
    %142 = vmatpush1.bf16.xpose.msra.mxu0 0
    %143 = vmatprep.subr.bf16.mxu0 0
    %144 = vmatpush1.bf16.xpose.msra.mxu0 0
    %145 = vmatprep.subr.bf16.mxu0 0
    %146 = vmatpush1.bf16.xpose.msra.mxu0 0
    %147 = vmatprep.subr.bf16.mxu0 0
    %148 = vmatpush1.bf16.xpose.msra.mxu0 0
    %149 = vmatprep.subr.bf16.mxu0 0
    %150 = vmatpush1.bf16.xpose.msra.mxu0 0
    %151 = vmatprep.subr.bf16.mxu0 0
    %152 = vmatpush1.bf16.xpose.msra.mxu0 0
    %153 = vmatprep.subr.bf16.mxu0 0
    %154 = vmatpush1.bf16.xpose.msra.mxu0 0
    %155 = vmatprep.mubr.bf16.mxu0 0
    %156 = vmatmul.mubr.bf16.gmra.mrb[0].mxu0 %v73
    %v157 = vpop.f32.mrb[0].mxu0
    %v158 = vadd.f32 %v67, %v157
    %v159 = vpop.f32.mrb[0].mxu0
    %v160 = vpop.f32.mrb[0].mxu0
    %v161 = vadd.f32 %v67, %v160
    %v162 = vpop.f32.mrb[0].mxu0
    %163 = vdwg.mxu0
    %164 = vst [vmem:[#allocation7] sm:$0xff] %v158
    %165 = vst [vmem:[#allocation7 + $0x8] sm:$0xff] %v161
    // Predicated region
    $region22: #{tpu_custom_call.1} parent=1 // pred_check
      _
    $region23: #{tpu_custom_call.1} parent=1 // pred_check_branch
      %167 = sbr.rel (0) target = $region25
    $region24: #{tpu_custom_call.1} parent=1 // pred_region
      %s169 = ssub.s32 256, 256
      %170 = vsyncadd [#allocation4], %s169
      %s171 = sshll.u32 [#allocation7], 4
      %s172 = int_to_ptr.vmem [resolvable:$true] %s171
      %177 = dma.vmem_to_hbm [thread:$0]  %s172, 256, %s3, [#allocation4], 128, 128, 8
    $region25: #{tpu_custom_call.1} parent=1 // pred_fallthru
      _
    // Predicated region
    $region26: #{tpu_custom_call.1} parent=1 // pred_check
      _
    $region27: #{tpu_custom_call.1} parent=1 // pred_check_branch
      %179 = sbr.rel (0) target = $region29
    $region28: #{tpu_custom_call.1} parent=1 // pred_region
      %180 = dma.done [#allocation4], 256
    $region29: #{tpu_custom_call.1} parent=1 // pred_fallthru
      _
    %181 = vsyncpa [#allocation3], 1
    %182 = vsyncpa [#allocation6], 1
    %183 = vsyncpa [#allocation4], 1

</llo_original>
